<compile_context>
chip_gen: v7x
topology: tpu7x:2x2x1
jax: 0.10.0
libtpu: 0.0.40
codegen_flags: <defaults>
</compile_context>

<pallas_src>
import jax
import jax.numpy as jnp
from jax.experimental import pallas as pl
from jax.experimental.pallas import tpu as pltpu

_GRIDLESS_MAX_B = 128               # above this, tile the batch (>=2 tiles -> both v7x TCs)
_VMEM_BUDGET = 8 * 1024 * 1024      # pipeline-buffer budget; fits v5e's 16 MiB scoped default


# ----------------------------------------------------------------------------- kernels
def _linear_logsoftmax_kernel(x_ref, wt_ref, b_ref, out_ref):
    """[TB, num_inputs] @ W^T [num_inputs, num_outputs] + b -> normalized logits."""
    raw = jnp.dot(x_ref[...], wt_ref[...], preferred_element_type=jnp.float32)
    raw = raw + b_ref[...].astype(jnp.float32)
    m = jnp.max(raw, axis=-1, keepdims=True)
    shifted = raw - m
    s = jnp.sum(jnp.exp(shifted), axis=-1, keepdims=True)
    out_ref[...] = (shifted - jnp.log(s)).astype(out_ref.dtype)


def _logsoftmax_kernel(x_ref, out_ref):
    """Skip-linear branch: x already has num_outputs features, no MXU pass."""
    raw = x_ref[...].astype(jnp.float32)
    m = jnp.max(raw, axis=-1, keepdims=True)
    shifted = raw - m
    s = jnp.sum(jnp.exp(shifted), axis=-1, keepdims=True)
    out_ref[...] = (shifted - jnp.log(s)).astype(out_ref.dtype)


# ----------------------------------------------------------------------------- params
def prepare_categorical_net_params(weight, bias, *, dtype=jnp.float32):
    """One-time prep (hoisted out of the hot path): transpose W to [num_inputs, num_outputs]
    and reshape bias to a [1, num_outputs] row.

    Pass dtype=jnp.bfloat16 *together with* bf16 activations from the producing layer to
    halve weight DMA and run the MXU at bf16 rate; bias stays f32 (softmax math is f32,
    required on v5e whose VPU/EUP have no bf16)."""
    wt = jnp.asarray(weight).T.astype(dtype)                    # [num_inputs, num_outputs]
    b = jnp.asarray(bias).astype(jnp.float32).reshape(1, -1)    # [1, num_outputs]
    return wt, b


# ----------------------------------------------------------------------------- tiling
def _round_up(v, m):
    return ((v + m - 1) // m) * m


def _pick_block_b(B, num_inputs, num_outputs, x_itemsize, w_itemsize):
    """Batch tile: >= 2 tiles (v7x megacore), <= ~512 rows, shrunk to fit the VMEM budget."""
    num_tiles = max(2, pl.cdiv(B, 512))
    block_b = _round_up(pl.cdiv(B, num_tiles), 8)

    def footprint(bb):
        x_bytes = 2 * bb * num_inputs * x_itemsize            # double-buffered input
        o_bytes = 2 * bb * num_outputs * 4                    # double-buffered logits out
        w_bytes = 2 * num_inputs * num_outputs * w_itemsize   # worst case: two weight buffers
        return x_bytes + o_bytes + w_bytes

    while footprint(block_b) > _VMEM_BUDGET and block_b > 8:
        block_b = max(8, _round_up(block_b // 2, 8))
    return block_b, footprint(block_b)


# ----------------------------------------------------------------------------- forward
def categorical_net_forward(x, wt, b, num_outputs):
    """x: [B, num_inputs]; wt/b from prepare_categorical_net_params.
    Returns normalized logits (log-probs), shape [B, num_outputs], dtype of x."""
    B, num_inputs = x.shape
    out_dtype = x.dtype
    out_shape = jax.ShapeDtypeStruct((B, num_outputs), out_dtype)

    # PyTorch forward skips the linear when the feature dim already equals num_outputs.
    if num_inputs == num_outputs:
        cost = pl.CostEstimate(
            flops=0,
            transcendentals=B * num_outputs,
            bytes_accessed=2 * B * num_outputs * x.dtype.itemsize,
        )
        if B <= _GRIDLESS_MAX_B:
            return pl.pallas_call(_logsoftmax_kernel, out_shape=out_shape,
                                  cost_estimate=cost)(x)
        block_b, _ = _pick_block_b(B, num_inputs, num_outputs, x.dtype.itemsize, 0)
        return pl.pallas_call(
            _logsoftmax_kernel,
            out_shape=out_shape,
            grid=(pl.cdiv(B, block_b),),
            in_specs=[pl.BlockSpec((block_b, num_outputs), lambda i: (i, 0))],
            out_specs=pl.BlockSpec((block_b, num_outputs), lambda i: (i, 0)),
            compiler_params=pltpu.CompilerParams(dimension_semantics=("parallel",)),
            cost_estimate=cost,
        )(x)

    cost = pl.CostEstimate(
        flops=2 * B * num_inputs * num_outputs,
        transcendentals=B * num_outputs,
        bytes_accessed=(B * num_inputs * x.dtype.itemsize
                        + num_inputs * num_outputs * wt.dtype.itemsize
                        + num_outputs * 4
                        + B * num_outputs * x.dtype.itemsize),
    )

    if B <= _GRIDLESS_MAX_B:
        # Latency path: whole problem in one VMEM block, no grid machinery.
        return pl.pallas_call(_linear_logsoftmax_kernel, out_shape=out_shape,
                              cost_estimate=cost)(x, wt, b)

    block_b, footprint = _pick_block_b(B, num_inputs, num_outputs,
                                       x.dtype.itemsize, wt.dtype.itemsize)
    grid = (pl.cdiv(B, block_b),)
    compiler_kwargs = dict(dimension_semantics=("parallel",))
    if footprint > 12 * 1024 * 1024:
        # Wide head: raise the scoped-VMEM limit instead of relying on the default.
        compiler_kwargs["vmem_limit_bytes"] = min(int(footprint * 1.5), 100 * 1024 * 1024)
    # TODO(synk): vocab-scale heads (num_inputs*num_outputs*dtype > ~1/4 VMEM) need an
    # N-tiled online-softmax grid axis instead of holding the full W VMEM-resident.

    def _call(single_buffer_params):
        wb_kwargs = {"pipeline_mode": pl.Buffered(1)} if single_buffer_params else {}
        return pl.pallas_call(
            _linear_logsoftmax_kernel,
            out_shape=out_shape,
            grid=grid,
            in_specs=[
                pl.BlockSpec((block_b, num_inputs), lambda i: (i, 0)),
                # Constant index_map -> weights/bias stay VMEM-resident across the grid;
                # a single pipeline buffer avoids wasting VMEM on a second copy.
                pl.BlockSpec((num_inputs, num_outputs), lambda i: (0, 0), **wb_kwargs),
                pl.BlockSpec((1, num_outputs), lambda i: (0, 0), **wb_kwargs),
            ],
            out_specs=pl.BlockSpec((block_b, num_outputs), lambda i: (i, 0)),
            compiler_params=pltpu.CompilerParams(**compiler_kwargs),
            cost_estimate=cost,
        )(x, wt, b)

    try:
        return _call(single_buffer_params=True)
    except Exception:  # pragma: no cover - JAX build without per-operand buffer counts
        return _call(single_buffer_params=False)


# ----------------------------------------------------------------------------- distribution
class CustomFixedCategorical:
    """JAX port of the PyTorch CustomFixedCategorical built on the kernel's normalized
    logits; probs are lazy (exact exp(logits)), matching torch.Categorical's lazy probs.
    sample / log_prob / mode are host-side glue (plain jnp), not kernels."""

    def __init__(self, logits):
        self.logits = logits                      # already normalized (log-probs)

    @property
    def probs(self):
        return jnp.exp(self.logits)

    def sample(self, key, sample_shape=()):
        g = jax.random.gumbel(key, tuple(sample_shape) + self.logits.shape, dtype=jnp.float32)
        return jnp.argmax(self.logits + g, axis=-1)[..., None]

    def log_prob(self, actions):
        idx = actions.reshape(actions.shape[0], -1)
        lp = jnp.take_along_axis(self.logits, idx, axis=-1)
        return lp.sum(-1, keepdims=True)

    def mode(self):
        return jnp.argmax(self.logits, axis=-1)[..., None]


def categorical_net(x, wt, b, num_outputs):
    """Full CategoricalNet.forward: (optional) linear head + Categorical distribution."""
    return CustomFixedCategorical(logits=categorical_net_forward(x, wt, b, num_outputs))


def orthogonal_init(key, rows, cols, gain=0.01):
    """Deterministic equivalent of nn.init.orthogonal_(weight, gain)."""
    a = jax.random.normal(key, (max(rows, cols), min(rows, cols)), dtype=jnp.float32)
    q, r = jnp.linalg.qr(a)
    d = jnp.sign(jnp.diag(r))
    q = q * d[None, :]
    if rows < cols:
        q = q.T
    return gain * q[:rows, :cols]


# ----------------------------------------------------------------------------- demo / checks
if __name__ == "__main__":
    key = jax.random.PRNGKey(0)
    k_x, k_w, k_x2, k_xb = jax.random.split(key, 4)

    num_inputs, num_outputs = 32, 8
    weight = orthogonal_init(k_w, num_outputs, num_inputs, gain=0.01)   # [out, in]
    bias = jnp.zeros((num_outputs,), dtype=jnp.float32)                 # constant 0

    # One-time param prep (transpose), outside the per-call hot path.
    wt, b = prepare_categorical_net_params(weight, bias, dtype=jnp.float32)

    def ref_normalized_logits(raw):
        return raw - jax.scipy.special.logsumexp(raw, axis=-1, keepdims=True)

    # --- small-batch latency path (linear branch) ---
    x = jax.random.normal(k_x, (2, num_inputs), dtype=jnp.float32)
    dist = categorical_net(x, wt, b, num_outputs)
    logits = jax.block_until_ready(dist.logits)
    raw_ref = jnp.dot(x, weight.T, precision=jax.lax.Precision.HIGHEST) + bias
    assert logits.shape == (2, num_outputs)
    assert jnp.allclose(logits, ref_normalized_logits(raw_ref), atol=1e-3), "logits mismatch"
    assert jnp.allclose(dist.probs, jax.nn.softmax(raw_ref, axis=-1), atol=1e-3), "probs mismatch"
    assert jnp.allclose(jnp.sum(dist.probs, axis=-1), 1.0, atol=1e-5)
    actions = dist.sample(jax.random.PRNGKey(1))
    assert actions.shape == (2, 1)
    assert dist.log_prob(actions).shape == (2, 1)
    assert dist.mode().shape == (2, 1)

    # --- batch-tiled path (>= 2 "parallel" tiles; VMEM-resident weights) ---
    xb = jax.random.normal(k_xb, (400, num_inputs), dtype=jnp.float32)
    logits_b = jax.block_until_ready(categorical_net_forward(xb, wt, b, num_outputs))
    raw_b = jnp.dot(xb, weight.T, precision=jax.lax.Precision.HIGHEST) + bias
    assert logits_b.shape == (400, num_outputs)
    assert jnp.allclose(logits_b, ref_normalized_logits(raw_b), atol=1e-3), "tiled logits mismatch"

    # --- skip-linear branch (x already has num_outputs features) ---
    x2 = jax.random.normal(k_x2, (2, num_outputs), dtype=jnp.float32)
    logits2 = jax.block_until_ready(categorical_net_forward(x2, wt, b, num_outputs))
    assert jnp.allclose(logits2, ref_normalized_logits(x2), atol=1e-5), "skip-linear mismatch"

    print("KERNEL_OK")
</pallas_src>

<mosaic_0001>
module attributes {stable_mosaic.version = 11 : i64} {
  func.func @_linear_logsoftmax_kernel(%arg0: memref<2x32xf32, #tpu.memory_space<vmem>>, %arg1: memref<32x8xf32, #tpu.memory_space<vmem>>, %arg2: memref<1x8xf32, #tpu.memory_space<vmem>>, %arg3: memref<2x8xf32, #tpu.memory_space<vmem>>) attributes {dimension_semantics = [], scalar_prefetch = 0 : i64, scratch_operands = 0 : i64, tpu.core_type = #tpu.core_type<tc>} {
    %c0 = arith.constant 0 : index
    %c0_0 = arith.constant 0 : index
    %0 = vector.load %arg0[%c0, %c0_0] : memref<2x32xf32, #tpu.memory_space<vmem>>, vector<2x32xf32>
    %c0_1 = arith.constant 0 : index
    %c0_2 = arith.constant 0 : index
    %1 = vector.load %arg1[%c0_1, %c0_2] : memref<32x8xf32, #tpu.memory_space<vmem>>, vector<32x8xf32>
    %cst = arith.constant dense<0.000000e+00> : vector<2x8xf32>
    %2 = tpu.matmul %0, %1, %cst {dimension_numbers = #tpu.dot_dimension_numbers<[1], [0], [0], [1], [0, 0, 1, 1], [], []>} : vector<2x32xf32>, vector<32x8xf32>, vector<2x8xf32> -> vector<2x8xf32>
    %c0_3 = arith.constant 0 : index
    %c0_4 = arith.constant 0 : index
    %3 = vector.load %arg2[%c0_3, %c0_4] : memref<1x8xf32, #tpu.memory_space<vmem>>, vector<1x8xf32>
    %4 = vector.broadcast %3 : vector<1x8xf32> to vector<2x8xf32>
    %5 = arith.addf %2, %4 : vector<2x8xf32>
    %cst_5 = arith.constant dense<0xFF800000> : vector<2xf32>
    %6 = vector.multi_reduction <maximumf>, %5, %cst_5 [1] : vector<2x8xf32> to vector<2xf32>
    %7 = vector.shape_cast %6 : vector<2xf32> to vector<2x1xf32>
    %8 = vector.broadcast %7 : vector<2x1xf32> to vector<2x8xf32>
    %9 = arith.subf %5, %8 : vector<2x8xf32>
    %10 = math.exp %9 : vector<2x8xf32>
    %cst_6 = arith.constant dense<0.000000e+00> : vector<2xf32>
    %11 = vector.multi_reduction <add>, %10, %cst_6 [1] : vector<2x8xf32> to vector<2xf32>
    %12 = vector.shape_cast %11 : vector<2xf32> to vector<2x1xf32>
    %13 = math.log %12 : vector<2x1xf32>
    %14 = vector.broadcast %13 : vector<2x1xf32> to vector<2x8xf32>
    %15 = arith.subf %9, %14 : vector<2x8xf32>
    %c0_7 = arith.constant 0 : index
    %c0_8 = arith.constant 0 : index
    %16 = vector.load %arg3[%c0_7, %c0_8] : memref<2x8xf32, #tpu.memory_space<vmem>>, vector<2x8xf32>
    tpu.vector_store %arg3[%c0_7, %c0_8], %15 {strides = array<i32>} : memref<2x8xf32, #tpu.memory_space<vmem>>, vector<2x8xf32>,
    return
  }
}

</mosaic_0001>

<llo_original>
// kernel: tpu_custom_call.1
$region0: #{tpu_custom_call.1}
  #allocation0 [shape = 'u32[]', space=smem, size = 0x4, offset = 0x4, fixed_abs, tag = 'smem constant byte address 0x4 - core index']
  #allocation1 [shape = 'u32[144,128]{1,0:T(1,128)}', space=vmem, size = 0x12000, scoped, tag = 'internal scratch']
  %s0 = inlined_call_operand.vmem [shape: f32[2,32], index: 0, kind: input, shape index: {}]
  %s1 = inlined_call_operand.vmem [shape: f32[32,8], index: 1, kind: input, shape index: {}]
  %s2 = inlined_call_operand.vmem [shape: f32[1,8], index: 2, kind: input, shape index: {}]
  %s3 = inlined_call_operand.hbm [shape: f32[2,8], index: 3, kind: output, shape index: {}]
  %s4 = sld [smem:[#allocation0]]
  $region22: #{tpu_custom_call.1} parent=0
    _
  %s6 = ssub.s32 1, %s4
  %s7 = scalar_select 0, %s6, %s4
  $region1: #{tpu_custom_call.1} parent=0
    #allocation2 [shape = 'u8[1024]{0}', space=vmem, size = 0x400, scoped, tag = 'output window, operand 0, single buffered']
    #allocation3 [shape = 's32[1]{0}', space=sflag, size = 0x4, scoped, tag = 'scoped memory for tpu_custom_call.1']
    %8 = vsyncpa [#allocation3], 0
    // Predicated region
    $region2: #{tpu_custom_call.1} parent=1 // pred_check
      _
    $region3: #{tpu_custom_call.1} parent=1 // pred_check_branch
      %10 = sbr.rel (0) target = $region5
    $region4: #{tpu_custom_call.1} parent=1 // pred_region
      _
    $region5: #{tpu_custom_call.1} parent=1 // pred_fallthru
      _
    // Predicated region
    $region6: #{tpu_custom_call.1} parent=1 // pred_check
      _
    $region7: #{tpu_custom_call.1} parent=1 // pred_check_branch
      %12 = sbr.rel (0) target = $region9
    $region8: #{tpu_custom_call.1} parent=1 // pred_region
      _
    $region9: #{tpu_custom_call.1} parent=1 // pred_fallthru
      _
    // Predicated region
    $region10: #{tpu_custom_call.1} parent=1 // pred_check
      _
    $region11: #{tpu_custom_call.1} parent=1 // pred_check_branch
      %14 = sbr.rel (0) target = $region13
    $region12: #{tpu_custom_call.1} parent=1 // pred_region
      _
    $region13: #{tpu_custom_call.1} parent=1 // pred_fallthru
      _
    %v15 = vld [vmem:[%s0] sm:$0x3]
    %v16 = vld [vmem:[%s1] sm:$0xff]
    %v17 = vld [vmem:[%s1 + $0x8] sm:$0xff]
    %v18 = vld [vmem:[%s1 + $0x10] sm:$0xff]
    %v19 = vld [vmem:[%s1 + $0x18] sm:$0xff]
    %v20 = vld [vmem:[%s2] sm:$0x1]
    %v22 = vlaneseq
    %v23 = vshrl.u32 %v22, 7
    %v24 = vsub.s32 0, %v23
    %v25 = vrot.slane %v20, %v24
    %vm27 = vcmask 261120
    %v29 = vsel %vm27, %v15, 0
    %31 = vmatprep.subr.mxu0 0.0
    %32 = vmatpush1.msra.mxu0 %v16
    %33 = vmatprep.subr.mxu0 0.0
    %34 = vmatpush1.msra.mxu0 %v17
    %35 = vmatprep.subr.mxu0 0.0
    %36 = vmatpush1.msra.mxu0 %v18
    %37 = vmatprep.subr.mxu0 0.0
    %38 = vmatpush1.msra.mxu0 %v19
    %39 = vmatprep.subr.mxu0 0.0
    %40 = vmatpush1.msra.mxu0 0.0
    %41 = vmatprep.subr.mxu0 0.0
    %42 = vmatpush1.msra.mxu0 0.0
    %43 = vmatprep.subr.mxu0 0.0
    %44 = vmatpush1.msra.mxu0 0.0
    %45 = vmatprep.subr.mxu0 0.0
    %46 = vmatpush1.msra.mxu0 0.0
    %47 = vmatprep.subr.mxu0 0.0
    %48 = vmatpush1.msra.mxu0 0.0
    %49 = vmatprep.subr.mxu0 0.0
    %50 = vmatpush1.msra.mxu0 0.0
    %51 = vmatprep.subr.mxu0 0.0
    %52 = vmatpush1.msra.mxu0 0.0
    %53 = vmatprep.subr.mxu0 0.0
    %54 = vmatpush1.msra.mxu0 0.0
    %55 = vmatprep.subr.mxu0 0.0
    %56 = vmatpush1.msra.mxu0 0.0
    %57 = vmatprep.subr.mxu0 0.0
    %58 = vmatpush1.msra.mxu0 0.0
    %59 = vmatprep.subr.mxu0 0.0
    %60 = vmatpush1.msra.mxu0 0.0
    %61 = vmatprep.subr.mxu0 0.0
    %62 = vmatpush1.msra.mxu0 0.0
    %63 = vmatprep.subr.mxu0 0.0
    %64 = vmatpush1.msra.mxu0 0.0
    %65 = vmatprep.subr.mxu0 0.0
    %66 = vmatpush1.msra.mxu0 0.0
    %67 = vmatprep.subr.mxu0 0.0
    %68 = vmatpush1.msra.mxu0 0.0
    %69 = vmatprep.subr.mxu0 0.0
    %70 = vmatpush1.msra.mxu0 0.0
    %71 = vmatprep.subr.mxu0 0.0
    %72 = vmatpush1.msra.mxu0 0.0
    %73 = vmatprep.subr.mxu0 0.0
    %74 = vmatpush1.msra.mxu0 0.0
    %75 = vmatprep.subr.mxu0 0.0
    %76 = vmatpush1.msra.mxu0 0.0
    %77 = vmatprep.subr.mxu0 0.0
    %78 = vmatpush1.msra.mxu0 0.0
    %79 = vmatprep.subr.mxu0 0.0
    %80 = vmatpush1.msra.mxu0 0.0
    %81 = vmatprep.subr.mxu0 0.0
    %82 = vmatpush1.msra.mxu0 0.0
    %83 = vmatprep.subr.mxu0 0.0
    %84 = vmatpush1.msra.mxu0 0.0
    %85 = vmatprep.subr.mxu0 0.0
    %86 = vmatpush1.msra.mxu0 0.0
    %87 = vmatprep.subr.mxu0 0.0
    %88 = vmatpush1.msra.mxu0 0.0
    %89 = vmatprep.subr.mxu0 0.0
    %90 = vmatpush1.msra.mxu0 0.0
    %91 = vmatprep.subr.mxu0 0.0
    %92 = vmatpush1.msra.mxu0 0.0
    %93 = vmatprep.subr.mxu0 0.0
    %94 = vmatpush1.msra.mxu0 0.0
    %95 = vmatprep.mubr.f32.mxu0 0.0
    %96 = vmatmul.mubr.f32.gmra.mrb[0].mxu0 %v29
    %v97 = vpop.f32.mrb[0].mxu0
    %v98 = vadd.f32 %v25, %v97
    %v99 = vpop.f32.mrb[0].mxu0
    %100 = vdwg.mxu0
    %vm101 = vcmask 58368
    %v102 = vsel %vm101, %v98, -inf
    %103 = vmax.xlane.f32.xlu0 %v102
    %v104 = vpop.xlane.xlu0 %103
    %v105 = vsub.f32 %v98, %v104
    %v106 = vmul.f32 %v105, 1.442695
    %v107 = vpow.pop %v106
    %v108 = vsel %vm101, %v107, 0.0
    %109 = vadd.xlane.f32.xlu0 %v108
    %v110 = vpop.xlane.xlu0 %109
    %v111 = vlog2.pop %v110
    %v112 = vmul.f32 %v111, 0.6931472
    %v113 = vsub.f32 %v105, %v112
    %114 = vst.msk [vmem:[#allocation2] sm:$0x3] %vm101, %v113
    // Predicated region
    $region14: #{tpu_custom_call.1} parent=1 // pred_check
      _
    $region15: #{tpu_custom_call.1} parent=1 // pred_check_branch
      %116 = sbr.rel (0) target = $region17
    $region16: #{tpu_custom_call.1} parent=1 // pred_region
      %s118 = ssub.s32 32, 32
      %119 = vsyncadd [#allocation3], %s118
      %s121 = sshll.u32 [#allocation2], 4
      %s122 = int_to_ptr.vmem [resolvable:$true] %s121
      %124 = dma.vmem_to_hbm [thread:$0]  %s122, 32, %s3, [#allocation3]
    $region17: #{tpu_custom_call.1} parent=1 // pred_fallthru
      _
    // Predicated region
    $region18: #{tpu_custom_call.1} parent=1 // pred_check
      _
    $region19: #{tpu_custom_call.1} parent=1 // pred_check_branch
      %126 = sbr.rel (0) target = $region21
    $region20: #{tpu_custom_call.1} parent=1 // pred_region
      %127 = dma.done [#allocation3], 32
    $region21: #{tpu_custom_call.1} parent=1 // pred_fallthru
      _
    %128 = vsyncpa [#allocation3], 1

</llo_original>
